<compile_context>
chip_gen: v7x
topology: tpu7x:2x2x1
jax: 0.10.0
libtpu: 0.0.40
codegen_flags: <defaults>
</compile_context>

<pallas_src>
import functools
import math

import jax
import jax.numpy as jnp
from jax.experimental import pallas as pl
from jax.experimental.pallas import tpu as pltpu


def _embedding_gather_kernel(ids_ref, emb_hbm, out_ref, buf, sem, *, scale, tn):
    # ids_ref : SMEM int32[(Np,)]   (scalar prefetch: DMA addresses)
    # emb_hbm : HBM  f32[(V, Dp)]   (raw ref, no auto-DMA of the table)
    # out_ref : VMEM f32[(tn, Dp)]  (auto-pipelined, lane-dense output tile)
    # buf     : VMEM f32[(tn, Dp)]  scratch landing buffer for gathered rows
    # sem     : DMA semaphores, shape (tn,)
    base = pl.program_id(0) * tn

    # Issue one row-gather DMA per token in this tile (all in flight together).
    @pl.loop(0, tn)
    def _(t):
        row = ids_ref[base + t]
        pltpu.make_async_copy(
            emb_hbm.at[pl.ds(row, 1)], buf.at[pl.ds(t, 1)], sem.at[t]
        ).start()

    # Wait for all rows to land.
    @pl.loop(0, tn)
    def _(t):
        pltpu.make_async_copy(
            emb_hbm.at[pl.ds(0, 1)], buf.at[pl.ds(t, 1)], sem.at[t]
        ).wait()

    # sqrt(d_model) scale on the VPU, lane-dense store of the whole tile.
    out_ref[...] = buf[...] * scale


def input_embedding(x, emb_table, *, token_tile=64):
    """x: int (B, S) token ids; emb_table: (V, D) f32. Returns (B, S, D) f32."""
    B, S = x.shape
    V, D = emb_table.shape
    scale = math.sqrt(D)  # sqrt(d_model), matching the PyTorch module

    # Lane-dense feature axis: pad D up to a multiple of 128 (table stays in HBM).
    Dp = ((D + 127) // 128) * 128
    emb = emb_table if Dp == D else jnp.pad(emb_table, ((0, 0), (0, Dp - D)))

    # Flatten and pad the token axis to a multiple of the token tile.
    N = B * S
    tn = min(token_tile, N)
    Np = ((N + tn - 1) // tn) * tn
    ids_flat = x.reshape(-1).astype(jnp.int32)
    if Np != N:
        ids_flat = jnp.pad(ids_flat, (0, Np - N))  # padded tokens gather row 0

    kernel = functools.partial(_embedding_gather_kernel, scale=scale, tn=tn)

    out_padded = pl.pallas_call(
        kernel,
        out_shape=jax.ShapeDtypeStruct((Np, Dp), jnp.float32),
        grid_spec=pltpu.PrefetchScalarGridSpec(
            num_scalar_prefetch=1,                        # ids -> SMEM
            grid=(Np // tn,),
            in_specs=[pl.BlockSpec(memory_space=pl.ANY)], # table stays in HBM
            out_specs=pl.BlockSpec((tn, Dp), lambda i, ids: (i, 0)),
            scratch_shapes=[
                pltpu.VMEM((tn, Dp), jnp.float32),
                pltpu.SemaphoreType.DMA((tn,)),
            ],
        ),
        compiler_params=pltpu.CompilerParams(
            dimension_semantics=("parallel",),  # token tiles are independent
        ),
    )(ids_flat, emb)

    return out_padded[:N, :D].reshape(B, S, D)


if __name__ == "__main__":
    vocab_size = 16
    d_model = 32
    batch = 2
    seq = 8

    key = jax.random.PRNGKey(0)
    k_emb, k_ids = jax.random.split(key)

    # Deterministic "weights" (PyTorch nn.Embedding init is N(0,1); synthetic here).
    emb_table = jax.random.normal(k_emb, (vocab_size, d_model), dtype=jnp.float32)
    x = jax.random.randint(k_ids, (batch, seq), 0, vocab_size, dtype=jnp.int32)

    out = input_embedding(x, emb_table)
    out = jax.block_until_ready(out)

    # Reference check (plain JAX gather * sqrt(d_model)).
    ref = emb_table[x] * math.sqrt(d_model)
    assert out.shape == (batch, seq, d_model)
    assert jnp.allclose(out, ref, atol=1e-5, rtol=1e-5)

    print("KERNEL_OK")
</pallas_src>

<mosaic_0001>
module attributes {stable_mosaic.version = 11 : i64} {
  func.func @_embedding_gather_kernel(%arg0: i32, %arg1: memref<16xi32, #tpu.memory_space<smem>>, %arg2: memref<16x128xf32, #tpu.memory_space<any>>, %arg3: memref<16x128xf32, #tpu.memory_space<vmem>>, %arg4: memref<16x128xf32, #tpu.memory_space<vmem>>, %arg5: memref<16x!tpu.dma_semaphore, #tpu.memory_space<semaphore_mem>>) attributes {dimension_semantics = [#tpu.dimension_semantics<parallel>], iteration_bounds = array<i64: 1>, scalar_prefetch = 1 : i64, scratch_operands = 2 : i64, tpu.core_type = #tpu.core_type<tc>, window_params = [{}, {transform_indices = @transform_1, window_bounds = array<i64: 16, 128>}]} {
    %c16_i32 = arith.constant 16 : i32
    %0 = arith.muli %arg0, %c16_i32 : i32
    %c0_i32 = arith.constant 0 : i32
    %c16_i32_0 = arith.constant 16 : i32
    %1 = arith.addi %c0_i32, %c16_i32_0 : i32
    %c1_i32 = arith.constant 1 : i32
    scf.for %arg6 = %c0_i32 to %1 step %c1_i32  : i32 {
      %c1_i32_9 = arith.constant 1 : i32
      %7 = arith.muli %arg6, %c1_i32_9 : i32
      %c0_i32_10 = arith.constant 0 : i32
      %8 = arith.addi %c0_i32_10, %7 : i32
      %9 = arith.addi %0, %8 : i32
      %10 = arith.index_cast %9 : i32 to index
      %11 = memref.load %arg1[%10] : memref<16xi32, #tpu.memory_space<smem>>
      %c0_i32_11 = arith.constant 0 : i32
      %12 = tpu.memref_slice %arg2[%11, %c0_i32_11] : memref<16x128xf32, #tpu.memory_space<any>> -> memref<1x128xf32, #tpu.memory_space<any>>
      %c0_i32_12 = arith.constant 0 : i32
      %13 = tpu.memref_slice %arg4[%8, %c0_i32_12] : memref<16x128xf32, #tpu.memory_space<vmem>> -> memref<1x128xf32, #tpu.memory_space<vmem>>
      %14 = tpu.memref_slice %arg5[%8] : memref<16x!tpu.dma_semaphore, #tpu.memory_space<semaphore_mem>> -> memref<1x!tpu.dma_semaphore, #tpu.memory_space<semaphore_mem>>
      %15 = tpu.memref_squeeze %14 : memref<1x!tpu.dma_semaphore, #tpu.memory_space<semaphore_mem>> -> memref<!tpu.dma_semaphore, #tpu.memory_space<semaphore_mem>>
      tpu.enqueue_dma source(%12 : memref<1x128xf32, #tpu.memory_space<any>>) target(%13 : memref<1x128xf32, #tpu.memory_space<vmem>>) target_semaphore(%15 : memref<!tpu.dma_semaphore, #tpu.memory_space<semaphore_mem>>)
    }
    %c16_i32_1 = arith.constant 16 : i32
    %c0_i32_2 = arith.constant 0 : i32
    %c16_i32_3 = arith.constant 16 : i32
    %2 = arith.addi %c0_i32_2, %c16_i32_3 : i32
    %c1_i32_4 = arith.constant 1 : i32
    scf.for %arg6 = %c0_i32_2 to %2 step %c1_i32_4  : i32 {
      %c1_i32_9 = arith.constant 1 : i32
      %7 = arith.muli %arg6, %c1_i32_9 : i32
      %c0_i32_10 = arith.constant 0 : i32
      %8 = arith.addi %c0_i32_10, %7 : i32
      %c0_i32_11 = arith.constant 0 : i32
      %c0_i32_12 = arith.constant 0 : i32
      %9 = tpu.memref_slice %arg2[%c0_i32_11, %c0_i32_12] : memref<16x128xf32, #tpu.memory_space<any>> -> memref<1x128xf32, #tpu.memory_space<any>>
      %c0_i32_13 = arith.constant 0 : i32
      %10 = tpu.memref_slice %arg4[%8, %c0_i32_13] : memref<16x128xf32, #tpu.memory_space<vmem>> -> memref<1x128xf32, #tpu.memory_space<vmem>>
      %11 = tpu.memref_slice %arg5[%8] : memref<16x!tpu.dma_semaphore, #tpu.memory_space<semaphore_mem>> -> memref<1x!tpu.dma_semaphore, #tpu.memory_space<semaphore_mem>>
      %12 = tpu.memref_squeeze %11 : memref<1x!tpu.dma_semaphore, #tpu.memory_space<semaphore_mem>> -> memref<!tpu.dma_semaphore, #tpu.memory_space<semaphore_mem>>
      tpu.wait_dma2 semaphore(%12 : memref<!tpu.dma_semaphore, #tpu.memory_space<semaphore_mem>>) src(%9 : memref<1x128xf32, #tpu.memory_space<any>>) dst(%10 : memref<1x128xf32, #tpu.memory_space<vmem>>)
    }
    %c16_i32_5 = arith.constant 16 : i32
    %c0 = arith.constant 0 : index
    %c0_6 = arith.constant 0 : index
    %3 = vector.load %arg4[%c0, %c0_6] : memref<16x128xf32, #tpu.memory_space<vmem>>, vector<16x128xf32>
    %cst = arith.constant 5.65685415 : f32
    %4 = vector.broadcast %cst : f32 to vector<16x128xf32>
    %5 = arith.mulf %3, %4 : vector<16x128xf32>
    %c0_7 = arith.constant 0 : index
    %c0_8 = arith.constant 0 : index
    %6 = vector.load %arg3[%c0_7, %c0_8] : memref<16x128xf32, #tpu.memory_space<vmem>>, vector<16x128xf32>
    tpu.vector_store %arg3[%c0_7, %c0_8], %5 {strides = array<i32>} : memref<16x128xf32, #tpu.memory_space<vmem>>, vector<16x128xf32>,
    return
  }
  func.func @transform_1(%arg0: i32, %arg1: memref<16xi32, #tpu.memory_space<smem>>) -> (i32, i32) {
    %c0_i32 = arith.constant 0 : i32
    %c0_i32_0 = arith.constant 0 : i32
    return %arg0, %c0_i32 : i32, i32
  }
}

</mosaic_0001>

<llo_original>
// kernel: tpu_custom_call.1
$region0: #{tpu_custom_call.1}
  #allocation0 [shape = 'u32[]', space=smem, size = 0x4, offset = 0x4, fixed_abs, tag = 'smem constant byte address 0x4 - core index']
  #allocation1 [shape = 'u32[144,128]{1,0:T(1,128)}', space=vmem, size = 0x12000, scoped, tag = 'internal scratch']
  #allocation2 [shape = 'f32[16,128]{1,0:T(8,128)}', space=vmem, size = 0x2000, scoped, tag = 'scratch operand']
  #allocation3 [shape = 's32[16]{0}', space=sflag, size = 0x40, scoped, tag = 'scratch operand']
  #allocation4 [shape = 's32[1]{0}', space=sflag, size = 0x4, scoped, tag = 'scoped memory for tpu_custom_call.1']
  #allocation5 [shape = 'u8[512]{0}', space=smem, size = 0x200, scoped, tag = 'prefetched SMEM operand 0']
  #allocation8 [shape = 's32[]', space=sflag, size = 0x4, offset = 0, fixed_abs, tag = 'sflag constant byte address 0x0 - dummy sync flag']
  #allocation9 [shape = 's32[]', space=sflag, size = 0x4, offset = 0, fixed_abs, tag = 'sflag constant byte address 0x0 - dummy sync flag']
  #allocation10 [shape = 'u32[]', space=smem, size = 0x4, offset = 0x44, fixed_abs, tag = 'smem constant byte address 0x44 - assertion arg 0']
  #allocation11 [shape = 'u32[]', space=smem, size = 0x4, offset = 0x48, fixed_abs, tag = 'smem constant byte address 0x48 - assertion arg 1']
  %s0 = inlined_call_operand.hbm [shape: s32[16], index: 0, kind: input, shape index: {}]
  %s1 = inlined_call_operand.hbm [shape: f32[16,128], index: 1, kind: input, shape index: {}]
  %s2 = inlined_call_operand.hbm [shape: f32[16,128], index: 2, kind: output, shape index: {}]
  %s3 = sld [smem:[#allocation0]]
  $region28: #{tpu_custom_call.1} parent=0
    _
  %s5 = ssub.s32 1, %s3
  %s6 = scalar_select 0, %s5, %s3
  %8 = dma.hbm_to_smem %s0, 16, [#allocation5], [#allocation4]
  %9 = dma.done [#allocation4], 16
  %10 = sfence
  $region1: #{tpu_custom_call.1} parent=0
    #allocation6 [shape = 'u8[8192]{0}', space=vmem, size = 0x2000, scoped, tag = 'output window, operand 0, single buffered']
    #allocation7 [shape = 's32[1]{0}', space=sflag, size = 0x4, scoped, tag = 'scoped memory for tpu_custom_call.1']
    %11 = vsyncpa [#allocation7], 0
    %s12 = smul.u32 0, 16
    loop: start=0, step=1, limit=16
    $region2: #{tpu_custom_call.1} parent=1 // loop_pre_header
      _
    $region3: #{tpu_custom_call.1} parent=1 // loop_header
      %s14 = sphi 0, %s18
      %p15 = scmp.ge.s32.totalorder %s14, 16
    $region4: #{tpu_custom_call.1} parent=1 // loop_header_branch
      %17 = sbr.rel (%p15) target = $region8
    $region5: #{tpu_custom_call.1} parent=1 // loop_body
      %s19 = sadd.s32 %s12, %s14
      %s20 = sld [smem:[#allocation5 + %s19]]
      %s21 = smul.addr %s20, 16
      %s22 = scalar_lea.hbm %s1, %s21
      %s23 = scalar_lea.vmem [#allocation2], %s14
      %s24 = scalar_lea.sflag [#allocation3], %s14
      // Predicated region
      $region9: #{tpu_custom_call.1} parent=5 // pred_check
        _
      $region10: #{tpu_custom_call.1} parent=5 // pred_check_branch
        %26 = sbr.rel target = $region12
      $region11: #{tpu_custom_call.1} parent=5 // pred_region
        %27 = sst [smem:[#allocation10]] [#allocation9]
        %28 = sst [smem:[#allocation11]] [#allocation8]
      $region12: #{tpu_custom_call.1} parent=5 // pred_fallthru
        _
      %30 = shalt.err (0)
      %s32 = sshll.u32 %s23, 4
      %s33 = int_to_ptr.vmem [resolvable:$true] %s32
      %35 = dma.hbm_to_vmem [thread:$0]  %s22, 16, %s33, %s24
    $region6: #{tpu_custom_call.1} parent=1 // loop_footer
      %s18 = sadd.s32 1, %s14
    $region7: #{tpu_custom_call.1} parent=1 // loop_footer_branch
      %13 = sbr.rel target = $region3
    $region8: #{tpu_custom_call.1} parent=1 // loop_exit
      _
    loop: start=0, step=1, limit=16
    $region13: #{tpu_custom_call.1} parent=1 // loop_pre_header
      _
    $region14: #{tpu_custom_call.1} parent=1 // loop_header
      %s37 = sphi 0, %s41
      %p38 = scmp.ge.s32.totalorder %s37, 16
    $region15: #{tpu_custom_call.1} parent=1 // loop_header_branch
      %40 = sbr.rel (%p38) target = $region19
    $region16: #{tpu_custom_call.1} parent=1 // loop_body
      %s42 = scalar_lea.sflag [#allocation3], %s37
      %s43 = smul.u32 1, 1
      %s44 = sshll.u32 %s43, 4
      %45 = dma.done %s42, %s44
    $region17: #{tpu_custom_call.1} parent=1 // loop_footer
      %s41 = sadd.s32 1, %s37
    $region18: #{tpu_custom_call.1} parent=1 // loop_footer_branch
      %36 = sbr.rel target = $region14
    $region19: #{tpu_custom_call.1} parent=1 // loop_exit
      _
    %v46 = vld [vmem:[#allocation2] sm:$0xff]
    %v47 = vld [vmem:[#allocation2 + $0x8] sm:$0xff]
    %v48 = vmul.f32 %v46, 5.656854
    %v49 = vmul.f32 %v47, 5.656854
    %50 = vst [vmem:[#allocation6] sm:$0xff] %v48
    %51 = vst [vmem:[#allocation6 + $0x8] sm:$0xff] %v49
    // Predicated region
    $region20: #{tpu_custom_call.1} parent=1 // pred_check
      _
    $region21: #{tpu_custom_call.1} parent=1 // pred_check_branch
      %53 = sbr.rel (0) target = $region23
    $region22: #{tpu_custom_call.1} parent=1 // pred_region
      %s55 = ssub.s32 256, 256
      %56 = vsyncadd [#allocation7], %s55
      %s57 = sshll.u32 [#allocation6], 4
      %s58 = int_to_ptr.vmem [resolvable:$true] %s57
      %63 = dma.vmem_to_hbm [thread:$0]  %s58, 256, %s2, [#allocation7], 128, 128, 8
    $region23: #{tpu_custom_call.1} parent=1 // pred_fallthru
      _
    // Predicated region
    $region24: #{tpu_custom_call.1} parent=1 // pred_check
      _
    $region25: #{tpu_custom_call.1} parent=1 // pred_check_branch
      %65 = sbr.rel (0) target = $region27
    $region26: #{tpu_custom_call.1} parent=1 // pred_region
      %66 = dma.done [#allocation7], 256
    $region27: #{tpu_custom_call.1} parent=1 // pred_fallthru
      _
    %67 = vsyncpa [#allocation7], 1
  %68 = vsyncmov [#allocation3]
  %s69 = vpop.sfrf %68
  %p70 = scmp.eq.s32.totalorder %s69, 0
  %p71 = pneg %p70
  %73 = shalt.err (%p71)
  %s74 = scalar_lea.sflag [#allocation3], 1
  %75 = vsyncmov %s74
  %s76 = vpop.sfrf %75
  %p77 = scmp.eq.s32.totalorder %s76, 0
  %p78 = pneg %p77
  %80 = shalt.err (%p78)
  %s81 = scalar_lea.sflag [#allocation3], 2
  %82 = vsyncmov %s81
  %s83 = vpop.sfrf %82
  %p84 = scmp.eq.s32.totalorder %s83, 0
  %p85 = pneg %p84
  %87 = shalt.err (%p85)
  %s88 = scalar_lea.sflag [#allocation3], 3
  %89 = vsyncmov %s88
  %s90 = vpop.sfrf %89
  %p91 = scmp.eq.s32.totalorder %s90, 0
  %p92 = pneg %p91
  %94 = shalt.err (%p92)
  %s95 = scalar_lea.sflag [#allocation3], 4
  %96 = vsyncmov %s95
  %s97 = vpop.sfrf %96
  %p98 = scmp.eq.s32.totalorder %s97, 0
  %p99 = pneg %p98
  %101 = shalt.err (%p99)
  %s102 = scalar_lea.sflag [#allocation3], 5
  %103 = vsyncmov %s102
  %s104 = vpop.sfrf %103
  %p105 = scmp.eq.s32.totalorder %s104, 0
  %p106 = pneg %p105
  %108 = shalt.err (%p106)
  %s109 = scalar_lea.sflag [#allocation3], 6
  %110 = vsyncmov %s109
  %s111 = vpop.sfrf %110
  %p112 = scmp.eq.s32.totalorder %s111, 0
  %p113 = pneg %p112
  %115 = shalt.err (%p113)
  %s116 = scalar_lea.sflag [#allocation3], 7
  %117 = vsyncmov %s116
  %s118 = vpop.sfrf %117
  %p119 = scmp.eq.s32.totalorder %s118, 0
  %p120 = pneg %p119
  %122 = shalt.err (%p120)
  %s123 = scalar_lea.sflag [#allocation3], 8
  %124 = vsyncmov %s123
  %s125 = vpop.sfrf %124
  %p126 = scmp.eq.s32.totalorder %s125, 0
  %p127 = pneg %p126
  %129 = shalt.err (%p127)
  %s130 = scalar_lea.sflag [#allocation3], 9
  %131 = vsyncmov %s130
  %s132 = vpop.sfrf %131
  %p133 = scmp.eq.s32.totalorder %s132, 0
  %p134 = pneg %p133
  %136 = shalt.err (%p134)
  %s137 = scalar_lea.sflag [#allocation3], 10
  %138 = vsyncmov %s137
  %s139 = vpop.sfrf %138
  %p140 = scmp.eq.s32.totalorder %s139, 0
  %p141 = pneg %p140
  %143 = shalt.err (%p141)
  %s144 = scalar_lea.sflag [#allocation3], 11
  %145 = vsyncmov %s144
  %s146 = vpop.sfrf %145
  %p147 = scmp.eq.s32.totalorder %s146, 0
  %p148 = pneg %p147
  %150 = shalt.err (%p148)
  %s151 = scalar_lea.sflag [#allocation3], 12
  %152 = vsyncmov %s151
  %s153 = vpop.sfrf %152
  %p154 = scmp.eq.s32.totalorder %s153, 0
  %p155 = pneg %p154
  %157 = shalt.err (%p155)
  %s158 = scalar_lea.sflag [#allocation3], 13
  %159 = vsyncmov %s158
  %s160 = vpop.sfrf %159
  %p161 = scmp.eq.s32.totalorder %s160, 0
  %p162 = pneg %p161
  %164 = shalt.err (%p162)
  %s165 = scalar_lea.sflag [#allocation3], 14
  %166 = vsyncmov %s165
  %s167 = vpop.sfrf %166
  %p168 = scmp.eq.s32.totalorder %s167, 0
  %p169 = pneg %p168
  %171 = shalt.err (%p169)
  %s172 = scalar_lea.sflag [#allocation3], 15
  %173 = vsyncmov %s172
  %s174 = vpop.sfrf %173
  %p175 = scmp.eq.s32.totalorder %s174, 0
  %p176 = pneg %p175
  %178 = shalt.err (%p176)

</llo_original>
